<compile_context>
chip_gen: v7x
topology: tpu7x:2x2x1
jax: 0.10.0
libtpu: 0.0.40
codegen_flags: <defaults>
</compile_context>

<pallas_src>
import functools
import math

import jax
import jax.numpy as jnp
import numpy as np
from jax.experimental import pallas as pl
from jax.experimental.pallas import tpu as pltpu


# ---------------------------------------------------------------------------
# Kernel 1: fused QKV projection + LayerNorm(q, k) + RoPE, row-tiled over S.
# q/k columns are in global [all-E | all-O] order (heads blocked inside each
# half); v is in natural layout.
# ---------------------------------------------------------------------------
def qkv_rope_kernel(x_ref, wqkv_ref, qg_ref, qb_ref, kg_ref, kb_ref,
                    cos_ref, sin_ref, qr_ref, kr_ref, v_ref,
                    *, n_heads, eps):
    D = x_ref.shape[2]
    Dh = D // 2

    x = x_ref[0]                                            # (ts, D) bf16
    # One fused MXU matmul: K = D, N = 3D, f32 accumulate.
    qkv = jnp.dot(x, wqkv_ref[...], preferred_element_type=jnp.float32)
    q = qkv[:, :D]
    k = qkv[:, D:2 * D]
    v = qkv[:, 2 * D:]

    def layer_norm(y, g, b):                                # f32 (v5e-safe)
        mu = jnp.mean(y, axis=-1, keepdims=True)
        var = jnp.mean((y - mu) ** 2, axis=-1, keepdims=True)
        return (y - mu) * jax.lax.rsqrt(var + eps) * g + b

    # 1/sqrt(head_dim) is pre-folded into qg/qb on the host.
    q = layer_norm(q, qg_ref[...], qb_ref[...])
    k = layer_norm(k, kg_ref[...], kb_ref[...])

    # cos/sin arrive compact (ts, head_dim/2); tile across heads in-kernel.
    cosw = jnp.tile(cos_ref[...], (1, n_heads))             # (ts, D/2) f32
    sinw = jnp.tile(sin_ref[...], (1, n_heads))

    # Full-width RoPE: two slab rotations over all heads at once.
    qE, qO = q[:, :Dh], q[:, Dh:]
    kE, kO = k[:, :Dh], k[:, Dh:]
    qr_ref[0, :, :Dh] = (qE * cosw - qO * sinw).astype(qr_ref.dtype)
    qr_ref[0, :, Dh:] = (qO * cosw + qE * sinw).astype(qr_ref.dtype)
    kr_ref[0, :, :Dh] = (kE * cosw - kO * sinw).astype(kr_ref.dtype)
    kr_ref[0, :, Dh:] = (kO * cosw + kE * sinw).astype(kr_ref.dtype)
    v_ref[0] = v.astype(v_ref.dtype)


# ---------------------------------------------------------------------------
# Kernel 2: per-head attention over a query tile + fused output projection.
# ---------------------------------------------------------------------------
def attention_kernel(q_ref, k_ref, v_ref, wo_ref, o_ref, attn_scr,
                     *, n_heads, head_dim):
    D = q_ref.shape[2]
    Dh = D // 2
    hd2 = head_dim // 2

    q = q_ref[0]                                            # (tq, D) bf16 [E|O]
    k = k_ref[0]                                            # (S,  D) bf16 [E|O]
    v = v_ref[0]                                            # (S,  D) bf16 natural

    dims = (((1,), (1,)), ((), ()))                         # contract last dims
    for h in range(n_heads):
        e0, e1 = h * hd2, (h + 1) * hd2
        lo, hi = h * head_dim, (h + 1) * head_dim
        # Two accumulated dots (E half then O half): no per-head concatenate.
        s = jax.lax.dot_general(q[:, e0:e1], k[:, e0:e1], dims,
                                preferred_element_type=jnp.float32)
        s = s + jax.lax.dot_general(q[:, Dh + e0:Dh + e1], k[:, Dh + e0:Dh + e1],
                                    dims, preferred_element_type=jnp.float32)
        # Softmax with deferred normalization (scale already folded into q).
        m = jnp.max(s, axis=-1, keepdims=True)
        e = jnp.exp(s - m)
        l = jnp.sum(e, axis=-1, keepdims=True)
        pv = jnp.dot(e.astype(jnp.bfloat16), v[:, lo:hi],
                     preferred_element_type=jnp.float32)    # (tq, head_dim)
        pv = pv * pl.reciprocal(l, approx=True)             # EUP slot
        attn_scr[:, lo:hi] = pv.astype(attn_scr.dtype)      # bf16 staging

    # Single full-depth output projection.
    o_ref[0] = jnp.dot(attn_scr[...], wo_ref[...],
                       preferred_element_type=jnp.float32)


# ---------------------------------------------------------------------------
# Wrapper
# ---------------------------------------------------------------------------
def attention_forward(x, params, cos, sin, n_heads, *, seq_tile=None, q_tile=None):
    B, S, D = x.shape
    head_dim = D // n_heads
    hd2 = head_dim // 2
    scale = 1.0 / math.sqrt(head_dim)

    ts = seq_tile if seq_tile is not None else S            # K1 row tile
    tq = q_tile if q_tile is not None else S                # K2 query tile
    assert S % ts == 0 and S % tq == 0

    # Global [all-heads-even | all-heads-odd] column permutation for q/k; heads
    # stay blocked inside each half so per-head E/O slices are contiguous.
    perm_e = np.concatenate([h * head_dim + np.arange(0, head_dim, 2)
                             for h in range(n_heads)])
    perm_o = np.concatenate([h * head_dim + np.arange(1, head_dim, 2)
                             for h in range(n_heads)])
    perm = np.concatenate([perm_e, perm_o])

    wq_t = jnp.transpose(params["wq"])[:, perm]              # (in, out) permuted
    wk_t = jnp.transpose(params["wk"])[:, perm]
    wv_t = jnp.transpose(params["wv"])                       # natural layout
    wqkv = jnp.concatenate([wq_t, wk_t, wv_t], axis=1).astype(jnp.bfloat16)
    wo_t = jnp.transpose(params["wo"]).astype(jnp.bfloat16)

    # Fold 1/sqrt(head_dim) into the q LayerNorm affine (commutes with RoPE).
    qg = (params["q_gamma"][perm] * scale).reshape(1, D).astype(jnp.float32)
    qb = (params["q_beta"][perm] * scale).reshape(1, D).astype(jnp.float32)
    kg = params["k_gamma"][perm].reshape(1, D).astype(jnp.float32)
    kb = params["k_beta"][perm].reshape(1, D).astype(jnp.float32)

    x16 = x.astype(jnp.bfloat16)                             # halve x HBM bytes
    cos32 = cos.astype(jnp.float32)                          # (S, head_dim/2)
    sin32 = sin.astype(jnp.float32)

    cparams = pltpu.CompilerParams(
        dimension_semantics=("parallel", "parallel"),
        vmem_limit_bytes=32 * 1024 * 1024)

    # ---- Kernel 1: QKV + LN + RoPE ---------------------------------------
    k1 = functools.partial(qkv_rope_kernel, n_heads=n_heads, eps=1e-5)
    qr, kr, v = pl.pallas_call(
        k1,
        out_shape=(jax.ShapeDtypeStruct((B, S, D), jnp.bfloat16),
                   jax.ShapeDtypeStruct((B, S, D), jnp.bfloat16),
                   jax.ShapeDtypeStruct((B, S, D), jnp.bfloat16)),
        grid_spec=pltpu.PrefetchScalarGridSpec(
            num_scalar_prefetch=0,
            grid=(B, S // ts),
            in_specs=[
                pl.BlockSpec((1, ts, D), lambda b, s: (b, s, 0)),   # x (bf16)
                pl.BlockSpec((D, 3 * D), lambda b, s: (0, 0)),      # wqkv
                pl.BlockSpec((1, D), lambda b, s: (0, 0)),          # q gamma*scale
                pl.BlockSpec((1, D), lambda b, s: (0, 0)),          # q beta*scale
                pl.BlockSpec((1, D), lambda b, s: (0, 0)),          # k gamma
                pl.BlockSpec((1, D), lambda b, s: (0, 0)),          # k beta
                pl.BlockSpec((ts, hd2), lambda b, s: (s, 0)),       # cos (compact)
                pl.BlockSpec((ts, hd2), lambda b, s: (s, 0)),       # sin (compact)
            ],
            out_specs=[
                pl.BlockSpec((1, ts, D), lambda b, s: (b, s, 0)),   # q_rot
                pl.BlockSpec((1, ts, D), lambda b, s: (b, s, 0)),   # k_rot
                pl.BlockSpec((1, ts, D), lambda b, s: (b, s, 0)),   # v
            ],
        ),
        compiler_params=cparams,
    )(x16, wqkv, qg, qb, kg, kb, cos32, sin32)

    # ---- Kernel 2: attention + Wo ----------------------------------------
    k2 = functools.partial(attention_kernel, n_heads=n_heads, head_dim=head_dim)
    out = pl.pallas_call(
        k2,
        out_shape=jax.ShapeDtypeStruct((B, S, D), jnp.float32),
        grid_spec=pltpu.PrefetchScalarGridSpec(
            num_scalar_prefetch=0,
            grid=(B, S // tq),
            in_specs=[
                pl.BlockSpec((1, tq, D), lambda b, q: (b, q, 0)),   # q_rot tile
                pl.BlockSpec((1, S, D), lambda b, q: (b, 0, 0)),    # k_rot (resident per batch)
                pl.BlockSpec((1, S, D), lambda b, q: (b, 0, 0)),    # v     (resident per batch)
                pl.BlockSpec((D, D), lambda b, q: (0, 0)),          # wo
            ],
            out_specs=pl.BlockSpec((1, tq, D), lambda b, q: (b, q, 0)),
            scratch_shapes=[pltpu.VMEM((tq, D), jnp.bfloat16)],     # bf16 PV staging
        ),
        compiler_params=cparams,
    )(qr, kr, v, wo_t)
    return out


# ---------------------------------------------------------------------------
# Pure-JAX reference (mirror of the PyTorch forward) for validation.
# ---------------------------------------------------------------------------
def reference_attention(x, params, cos, sin, n_heads):
    B, S, D = x.shape
    hd = D // n_heads

    q = x @ params["wq"].T
    k = x @ params["wk"].T
    v = x @ params["wv"].T

    def ln(y, g, b):
        mu = y.mean(-1, keepdims=True)
        var = ((y - mu) ** 2).mean(-1, keepdims=True)
        return (y - mu) / jnp.sqrt(var + 1e-5) * g + b

    q = ln(q, params["q_gamma"], params["q_beta"])
    k = ln(k, params["k_gamma"], params["k_beta"])
    q = q.reshape(B, S, n_heads, hd)
    k = k.reshape(B, S, n_heads, hd)
    v = v.reshape(B, S, n_heads, hd)

    def rope(t):
        tE, tO = t[..., 0::2], t[..., 1::2]
        c = cos[None, :, None, :]
        s = sin[None, :, None, :]
        rE = tE * c - tO * s
        rO = tO * c + tE * s
        return jnp.stack([rE, rO], axis=-1).reshape(t.shape)

    q, k = rope(q), rope(k)
    scale = 1.0 / math.sqrt(hd)
    scores = jnp.einsum("bqhd,bkhd->bhqk", q, k) * scale
    p = jax.nn.softmax(scores, axis=-1)
    out = jnp.einsum("bhqk,bkhd->bqhd", p, v).reshape(B, S, D)
    return out @ params["wo"].T


if __name__ == "__main__":
    B, S, n_heads, head_dim = 2, 8, 4, 8
    D = n_heads * head_dim

    key = jax.random.PRNGKey(0)
    keys = jax.random.split(key, 9)
    wscale = 1.0 / math.sqrt(D)
    params = {
        "wq": jax.random.normal(keys[0], (D, D), jnp.float32) * wscale,
        "wk": jax.random.normal(keys[1], (D, D), jnp.float32) * wscale,
        "wv": jax.random.normal(keys[2], (D, D), jnp.float32) * wscale,
        "wo": jax.random.normal(keys[3], (D, D), jnp.float32) * wscale,
        "q_gamma": 1.0 + 0.1 * jax.random.normal(keys[4], (D,), jnp.float32),
        "q_beta": 0.1 * jax.random.normal(keys[5], (D,), jnp.float32),
        "k_gamma": 1.0 + 0.1 * jax.random.normal(keys[6], (D,), jnp.float32),
        "k_beta": 0.1 * jax.random.normal(keys[7], (D,), jnp.float32),
    }
    x = jax.random.normal(keys[8], (B, S, D), jnp.float32)

    # freqs_cis as cos/sin of shape (S, head_dim // 2), standard RoPE freqs.
    inv_freq = 1.0 / (10000.0 ** (np.arange(0, head_dim, 2, dtype=np.float32)
                                  / head_dim))
    freqs = np.outer(np.arange(S, dtype=np.float32), inv_freq)
    cos = jnp.asarray(np.cos(freqs), jnp.float32)
    sin = jnp.asarray(np.sin(freqs), jnp.float32)

    out = attention_forward(x, params, cos, sin, n_heads)
    out = jax.block_until_ready(out)

    ref = reference_attention(x, params, cos, sin, n_heads)
    assert out.shape == (B, S, D)
    np.testing.assert_allclose(np.asarray(out), np.asarray(ref),
                               rtol=5e-2, atol=5e-2)
    print("KERNEL_OK")
</pallas_src>

<mosaic_0001>
module attributes {stable_mosaic.version = 11 : i64} {
  func.func @qkv_rope_kernel(%arg0: i32, %arg1: i32, %arg2: memref<1x8x32xbf16, #tpu.memory_space<vmem>>, %arg3: memref<32x96xbf16, #tpu.memory_space<vmem>>, %arg4: memref<1x32xf32, #tpu.memory_space<vmem>>, %arg5: memref<1x32xf32, #tpu.memory_space<vmem>>, %arg6: memref<1x32xf32, #tpu.memory_space<vmem>>, %arg7: memref<1x32xf32, #tpu.memory_space<vmem>>, %arg8: memref<8x4xf32, #tpu.memory_space<vmem>>, %arg9: memref<8x4xf32, #tpu.memory_space<vmem>>, %arg10: memref<1x8x32xbf16, #tpu.memory_space<vmem>>, %arg11: memref<1x8x32xbf16, #tpu.memory_space<vmem>>, %arg12: memref<1x8x32xbf16, #tpu.memory_space<vmem>>) attributes {dimension_semantics = [#tpu.dimension_semantics<parallel>, #tpu.dimension_semantics<parallel>], iteration_bounds = array<i64: 2, 1>, scalar_prefetch = 0 : i64, scratch_operands = 0 : i64, tpu.core_type = #tpu.core_type<tc>, window_params = [{transform_indices = @transform_0, window_bounds = array<i64: 1, 8, 32>}, {pipeline_mode = #tpu.pipeline_mode<synchronous>, transform_indices = @transform_1, window_bounds = array<i64: 32, 96>}, {pipeline_mode = #tpu.pipeline_mode<synchronous>, transform_indices = @transform_2, window_bounds = array<i64: 1, 32>}, {pipeline_mode = #tpu.pipeline_mode<synchronous>, transform_indices = @transform_3, window_bounds = array<i64: 1, 32>}, {pipeline_mode = #tpu.pipeline_mode<synchronous>, transform_indices = @transform_4, window_bounds = array<i64: 1, 32>}, {pipeline_mode = #tpu.pipeline_mode<synchronous>, transform_indices = @transform_5, window_bounds = array<i64: 1, 32>}, {transform_indices = @transform_6, window_bounds = array<i64: 8, 4>}, {transform_indices = @transform_7, window_bounds = array<i64: 8, 4>}, {transform_indices = @transform_8, window_bounds = array<i64: 1, 8, 32>}, {transform_indices = @transform_9, window_bounds = array<i64: 1, 8, 32>}, {transform_indices = @transform_10, window_bounds = array<i64: 1, 8, 32>}]} {
    %c0 = arith.constant 0 : index
    %c0_0 = arith.constant 0 : index
    %c0_1 = arith.constant 0 : index
    %0 = vector.load %arg2[%c0, %c0_0, %c0_1] : memref<1x8x32xbf16, #tpu.memory_space<vmem>>, vector<1x8x32xbf16>
    %1 = vector.shape_cast %0 : vector<1x8x32xbf16> to vector<8x32xbf16>
    %c0_2 = arith.constant 0 : index
    %c0_3 = arith.constant 0 : index
    %2 = vector.load %arg3[%c0_2, %c0_3] : memref<32x96xbf16, #tpu.memory_space<vmem>>, vector<32x96xbf16>
    %cst = arith.constant dense<0.000000e+00> : vector<8x96xf32>
    %3 = tpu.matmul %1, %2, %cst {dimension_numbers = #tpu.dot_dimension_numbers<[1], [0], [0], [1], [0, 0, 1, 1], [], []>} : vector<8x32xbf16>, vector<32x96xbf16>, vector<8x96xf32> -> vector<8x96xf32>
    %4 = vector.extract_strided_slice %3 {offsets = [0, 0], sizes = [8, 32], strides = [1, 1]} : vector<8x96xf32> to vector<8x32xf32>
    %5 = vector.extract_strided_slice %3 {offsets = [0, 32], sizes = [8, 32], strides = [1, 1]} : vector<8x96xf32> to vector<8x32xf32>
    %6 = vector.extract_strided_slice %3 {offsets = [0, 64], sizes = [8, 32], strides = [1, 1]} : vector<8x96xf32> to vector<8x32xf32>
    %c0_4 = arith.constant 0 : index
    %c0_5 = arith.constant 0 : index
    %7 = vector.load %arg4[%c0_4, %c0_5] : memref<1x32xf32, #tpu.memory_space<vmem>>, vector<1x32xf32>
    %c0_6 = arith.constant 0 : index
    %c0_7 = arith.constant 0 : index
    %8 = vector.load %arg5[%c0_6, %c0_7] : memref<1x32xf32, #tpu.memory_space<vmem>>, vector<1x32xf32>
    %cst_8 = arith.constant dense<0.000000e+00> : vector<8xf32>
    %9 = vector.multi_reduction <add>, %4, %cst_8 [1] : vector<8x32xf32> to vector<8xf32>
    %10 = vector.shape_cast %9 : vector<8xf32> to vector<8x1xf32>
    %cst_9 = arith.constant 3.200000e+01 : f32
    %11 = vector.broadcast %cst_9 : f32 to vector<8x1xf32>
    %12 = arith.divf %10, %11 : vector<8x1xf32>
    %13 = vector.broadcast %12 : vector<8x1xf32> to vector<8x32xf32>
    %14 = arith.subf %4, %13 : vector<8x32xf32>
    %15 = arith.mulf %14, %14 : vector<8x32xf32>
    %cst_10 = arith.constant dense<0.000000e+00> : vector<8xf32>
    %16 = vector.multi_reduction <add>, %15, %cst_10 [1] : vector<8x32xf32> to vector<8xf32>
    %17 = vector.shape_cast %16 : vector<8xf32> to vector<8x1xf32>
    %cst_11 = arith.constant 3.200000e+01 : f32
    %18 = vector.broadcast %cst_11 : f32 to vector<8x1xf32>
    %19 = arith.divf %17, %18 : vector<8x1xf32>
    %20 = vector.broadcast %12 : vector<8x1xf32> to vector<8x32xf32>
    %21 = arith.subf %4, %20 : vector<8x32xf32>
    %cst_12 = arith.constant 9.99999974E-6 : f32
    %22 = vector.broadcast %cst_12 : f32 to vector<8x1xf32>
    %23 = arith.addf %19, %22 : vector<8x1xf32>
    %24 = math.rsqrt %23 : vector<8x1xf32>
    %25 = vector.broadcast %24 : vector<8x1xf32> to vector<8x32xf32>
    %26 = arith.mulf %21, %25 : vector<8x32xf32>
    %27 = vector.broadcast %7 : vector<1x32xf32> to vector<8x32xf32>
    %28 = arith.mulf %26, %27 : vector<8x32xf32>
    %29 = vector.broadcast %8 : vector<1x32xf32> to vector<8x32xf32>
    %30 = arith.addf %28, %29 : vector<8x32xf32>
    %c0_13 = arith.constant 0 : index
    %c0_14 = arith.constant 0 : index
    %31 = vector.load %arg6[%c0_13, %c0_14] : memref<1x32xf32, #tpu.memory_space<vmem>>, vector<1x32xf32>
    %c0_15 = arith.constant 0 : index
    %c0_16 = arith.constant 0 : index
    %32 = vector.load %arg7[%c0_15, %c0_16] : memref<1x32xf32, #tpu.memory_space<vmem>>, vector<1x32xf32>
    %cst_17 = arith.constant dense<0.000000e+00> : vector<8xf32>
    %33 = vector.multi_reduction <add>, %5, %cst_17 [1] : vector<8x32xf32> to vector<8xf32>
    %34 = vector.shape_cast %33 : vector<8xf32> to vector<8x1xf32>
    %cst_18 = arith.constant 3.200000e+01 : f32
    %35 = vector.broadcast %cst_18 : f32 to vector<8x1xf32>
    %36 = arith.divf %34, %35 : vector<8x1xf32>
    %37 = vector.broadcast %36 : vector<8x1xf32> to vector<8x32xf32>
    %38 = arith.subf %5, %37 : vector<8x32xf32>
    %39 = arith.mulf %38, %38 : vector<8x32xf32>
    %cst_19 = arith.constant dense<0.000000e+00> : vector<8xf32>
    %40 = vector.multi_reduction <add>, %39, %cst_19 [1] : vector<8x32xf32> to vector<8xf32>
    %41 = vector.shape_cast %40 : vector<8xf32> to vector<8x1xf32>
    %cst_20 = arith.constant 3.200000e+01 : f32
    %42 = vector.broadcast %cst_20 : f32 to vector<8x1xf32>
    %43 = arith.divf %41, %42 : vector<8x1xf32>
    %44 = vector.broadcast %36 : vector<8x1xf32> to vector<8x32xf32>
    %45 = arith.subf %5, %44 : vector<8x32xf32>
    %cst_21 = arith.constant 9.99999974E-6 : f32
    %46 = vector.broadcast %cst_21 : f32 to vector<8x1xf32>
    %47 = arith.addf %43, %46 : vector<8x1xf32>
    %48 = math.rsqrt %47 : vector<8x1xf32>
    %49 = vector.broadcast %48 : vector<8x1xf32> to vector<8x32xf32>
    %50 = arith.mulf %45, %49 : vector<8x32xf32>
    %51 = vector.broadcast %31 : vector<1x32xf32> to vector<8x32xf32>
    %52 = arith.mulf %50, %51 : vector<8x32xf32>
    %53 = vector.broadcast %32 : vector<1x32xf32> to vector<8x32xf32>
    %54 = arith.addf %52, %53 : vector<8x32xf32>
    %c0_22 = arith.constant 0 : index
    %c0_23 = arith.constant 0 : index
    %55 = vector.load %arg8[%c0_22, %c0_23] : memref<8x4xf32, #tpu.memory_space<vmem>>, vector<8x4xf32>
    %56 = tpu.concatenate %55, %55, %55, %55 in 1 : vector<8x4xf32>, vector<8x4xf32>, vector<8x4xf32>, vector<8x4xf32> -> vector<8x16xf32>
    %c0_24 = arith.constant 0 : index
    %c0_25 = arith.constant 0 : index
    %57 = vector.load %arg9[%c0_24, %c0_25] : memref<8x4xf32, #tpu.memory_space<vmem>>, vector<8x4xf32>
    %58 = tpu.concatenate %57, %57, %57, %57 in 1 : vector<8x4xf32>, vector<8x4xf32>, vector<8x4xf32>, vector<8x4xf32> -> vector<8x16xf32>
    %59 = vector.extract_strided_slice %30 {offsets = [0, 0], sizes = [8, 16], strides = [1, 1]} : vector<8x32xf32> to vector<8x16xf32>
    %60 = vector.extract_strided_slice %30 {offsets = [0, 16], sizes = [8, 16], strides = [1, 1]} : vector<8x32xf32> to vector<8x16xf32>
    %61 = vector.extract_strided_slice %54 {offsets = [0, 0], sizes = [8, 16], strides = [1, 1]} : vector<8x32xf32> to vector<8x16xf32>
    %62 = vector.extract_strided_slice %54 {offsets = [0, 16], sizes = [8, 16], strides = [1, 1]} : vector<8x32xf32> to vector<8x16xf32>
    %63 = arith.mulf %59, %56 : vector<8x16xf32>
    %64 = arith.mulf %60, %58 : vector<8x16xf32>
    %65 = arith.subf %63, %64 : vector<8x16xf32>
    %66 = arith.truncf %65 : vector<8x16xf32> to vector<8x16xbf16>
    %c0_26 = arith.constant 0 : index
    %c0_27 = arith.constant 0 : index
    %c0_28 = arith.constant 0 : index
    %67 = vector.load %arg10[%c0_26, %c0_27, %c0_28] : memref<1x8x32xbf16, #tpu.memory_space<vmem>>, vector<1x8x16xbf16>
    %68 = vector.shape_cast %67 : vector<1x8x16xbf16> to vector<8x16xbf16>
    %69 = vector.shape_cast %66 : vector<8x16xbf16> to vector<1x8x16xbf16>
    tpu.vector_store %arg10[%c0_26, %c0_27, %c0_28], %69 {strides = array<i32>} : memref<1x8x32xbf16, #tpu.memory_space<vmem>>, vector<1x8x16xbf16>,
    %70 = arith.mulf %60, %56 : vector<8x16xf32>
    %71 = arith.mulf %59, %58 : vector<8x16xf32>
    %72 = arith.addf %70, %71 : vector<8x16xf32>
    %73 = arith.truncf %72 : vector<8x16xf32> to vector<8x16xbf16>
    %c0_29 = arith.constant 0 : index
    %c0_30 = arith.constant 0 : index
    %c16 = arith.constant 16 : index
    %74 = vector.load %arg10[%c0_29, %c0_30, %c16] : memref<1x8x32xbf16, #tpu.memory_space<vmem>>, vector<1x8x16xbf16>
    %75 = vector.shape_cast %74 : vector<1x8x16xbf16> to vector<8x16xbf16>
    %76 = vector.shape_cast %73 : vector<8x16xbf16> to vector<1x8x16xbf16>
    tpu.vector_store %arg10[%c0_29, %c0_30, %c16], %76 {strides = array<i32>} : memref<1x8x32xbf16, #tpu.memory_space<vmem>>, vector<1x8x16xbf16>,
    %77 = arith.mulf %61, %56 : vector<8x16xf32>
    %78 = arith.mulf %62, %58 : vector<8x16xf32>
    %79 = arith.subf %77, %78 : vector<8x16xf32>
    %80 = arith.truncf %79 : vector<8x16xf32> to vector<8x16xbf16>
    %c0_31 = arith.constant 0 : index
    %c0_32 = arith.constant 0 : index
    %c0_33 = arith.constant 0 : index
    %81 = vector.load %arg11[%c0_31, %c0_32, %c0_33] : memref<1x8x32xbf16, #tpu.memory_space<vmem>>, vector<1x8x16xbf16>
    %82 = vector.shape_cast %81 : vector<1x8x16xbf16> to vector<8x16xbf16>
    %83 = vector.shape_cast %80 : vector<8x16xbf16> to vector<1x8x16xbf16>
    tpu.vector_store %arg11[%c0_31, %c0_32, %c0_33], %83 {strides = array<i32>} : memref<1x8x32xbf16, #tpu.memory_space<vmem>>, vector<1x8x16xbf16>,
    %84 = arith.mulf %62, %56 : vector<8x16xf32>
    %85 = arith.mulf %61, %58 : vector<8x16xf32>
    %86 = arith.addf %84, %85 : vector<8x16xf32>
    %87 = arith.truncf %86 : vector<8x16xf32> to vector<8x16xbf16>
    %c0_34 = arith.constant 0 : index
    %c0_35 = arith.constant 0 : index
    %c16_36 = arith.constant 16 : index
    %88 = vector.load %arg11[%c0_34, %c0_35, %c16_36] : memref<1x8x32xbf16, #tpu.memory_space<vmem>>, vector<1x8x16xbf16>
    %89 = vector.shape_cast %88 : vector<1x8x16xbf16> to vector<8x16xbf16>
    %90 = vector.shape_cast %87 : vector<8x16xbf16> to vector<1x8x16xbf16>
    tpu.vector_store %arg11[%c0_34, %c0_35, %c16_36], %90 {strides = array<i32>} : memref<1x8x32xbf16, #tpu.memory_space<vmem>>, vector<1x8x16xbf16>,
    %91 = arith.truncf %6 : vector<8x32xf32> to vector<8x32xbf16>
    %c0_37 = arith.constant 0 : index
    %c0_38 = arith.constant 0 : index
    %c0_39 = arith.constant 0 : index
    %92 = vector.load %arg12[%c0_37, %c0_38, %c0_39] : memref<1x8x32xbf16, #tpu.memory_space<vmem>>, vector<1x8x32xbf16>
    %93 = vector.shape_cast %92 : vector<1x8x32xbf16> to vector<8x32xbf16>
    %94 = vector.shape_cast %91 : vector<8x32xbf16> to vector<1x8x32xbf16>
    tpu.vector_store %arg12[%c0_37, %c0_38, %c0_39], %94 {strides = array<i32>} : memref<1x8x32xbf16, #tpu.memory_space<vmem>>, vector<1x8x32xbf16>,
    return
  }
  func.func @transform_0(%arg0: i32, %arg1: i32) -> (i32, i32, i32) {
    %c0_i32 = arith.constant 0 : i32
    %c0_i32_0 = arith.constant 0 : i32
    return %arg0, %arg1, %c0_i32 : i32, i32, i32
  }
  func.func @transform_1(%arg0: i32, %arg1: i32) -> (i32, i32) {
    %c0_i32 = arith.constant 0 : i32
    %c0_i32_0 = arith.constant 0 : i32
    %c0_i32_1 = arith.constant 0 : i32
    return %c0_i32, %c0_i32_0 : i32, i32
  }
  func.func @transform_2(%arg0: i32, %arg1: i32) -> (i32, i32) {
    %c0_i32 = arith.constant 0 : i32
    %c0_i32_0 = arith.constant 0 : i32
    %c0_i32_1 = arith.constant 0 : i32
    return %c0_i32, %c0_i32_0 : i32, i32
  }
  func.func @transform_3(%arg0: i32, %arg1: i32) -> (i32, i32) {
    %c0_i32 = arith.constant 0 : i32
    %c0_i32_0 = arith.constant 0 : i32
    %c0_i32_1 = arith.constant 0 : i32
    return %c0_i32, %c0_i32_0 : i32, i32
  }
  func.func @transform_4(%arg0: i32, %arg1: i32) -> (i32, i32) {
    %c0_i32 = arith.constant 0 : i32
    %c0_i32_0 = arith.constant 0 : i32
    %c0_i32_1 = arith.constant 0 : i32
    return %c0_i32, %c0_i32_0 : i32, i32
  }
  func.func @transform_5(%arg0: i32, %arg1: i32) -> (i32, i32) {
    %c0_i32 = arith.constant 0 : i32
    %c0_i32_0 = arith.constant 0 : i32
    %c0_i32_1 = arith.constant 0 : i32
    return %c0_i32, %c0_i32_0 : i32, i32
  }
  func.func @transform_6(%arg0: i32, %arg1: i32) -> (i32, i32) {
    %c0_i32 = arith.constant 0 : i32
    %c0_i32_0 = arith.constant 0 : i32
    return %arg1, %c0_i32 : i32, i32
  }
  func.func @transform_7(%arg0: i32, %arg1: i32) -> (i32, i32) {
    %c0_i32 = arith.constant 0 : i32
    %c0_i32_0 = arith.constant 0 : i32
    return %arg1, %c0_i32 : i32, i32
  }
  func.func @transform_8(%arg0: i32, %arg1: i32) -> (i32, i32, i32) {
    %c0_i32 = arith.constant 0 : i32
    %c0_i32_0 = arith.constant 0 : i32
    return %arg0, %arg1, %c0_i32 : i32, i32, i32
  }
  func.func @transform_9(%arg0: i32, %arg1: i32) -> (i32, i32, i32) {
    %c0_i32 = arith.constant 0 : i32
    %c0_i32_0 = arith.constant 0 : i32
    return %arg0, %arg1, %c0_i32 : i32, i32, i32
  }
  func.func @transform_10(%arg0: i32, %arg1: i32) -> (i32, i32, i32) {
    %c0_i32 = arith.constant 0 : i32
    %c0_i32_0 = arith.constant 0 : i32
    return %arg0, %arg1, %c0_i32 : i32, i32, i32
  }
}

</mosaic_0001>

<llo_original>
// kernel: tpu_custom_call.1
$region0: #{tpu_custom_call.1}
  #allocation0 [shape = 'u32[]', space=smem, size = 0x4, offset = 0x4, fixed_abs, tag = 'smem constant byte address 0x4 - core index']
  #allocation1 [shape = 'u32[144,128]{1,0:T(1,128)}', space=vmem, size = 0x12000, scoped, tag = 'internal scratch']
  %s0 = inlined_call_operand.vmem [shape: bf16[2,8,32], index: 0, kind: input, shape index: {}]
  %s1 = inlined_call_operand.vmem [shape: bf16[32,96], index: 1, kind: input, shape index: {}]
  %s2 = inlined_call_operand.vmem [shape: f32[1,32], index: 2, kind: input, shape index: {}]
  %s3 = inlined_call_operand.vmem [shape: f32[1,32], index: 3, kind: input, shape index: {}]
  %s4 = inlined_call_operand.vmem [shape: f32[1,32], index: 4, kind: input, shape index: {}]
  %s5 = inlined_call_operand.vmem [shape: f32[1,32], index: 5, kind: input, shape index: {}]
  %s6 = inlined_call_operand.vmem [shape: f32[8,4], index: 6, kind: input, shape index: {}]
  %s7 = inlined_call_operand.vmem [shape: f32[8,4], index: 7, kind: input, shape index: {}]
  %s8 = inlined_call_operand.hbm [shape: bf16[2,8,32], index: 8, kind: output, shape index: {0}]
  %s9 = inlined_call_operand.hbm [shape: bf16[2,8,32], index: 9, kind: output, shape index: {1}]
  %s10 = inlined_call_operand.hbm [shape: bf16[2,8,32], index: 10, kind: output, shape index: {2}]
  %11 = xla_tuple %s8, %s9, %s10
  %s12 = sld [smem:[#allocation0]]
  $region81: #{tpu_custom_call.1} parent=0
    _
  %s14 = ssub.s32 1, %s12
  %s15 = scalar_select 0, %s14, %s12
  $region1: #{tpu_custom_call.1} parent=0
    #allocation2 [shape = 'u8[4096]{0}', space=vmem, size = 0x1000, scoped, tag = 'output window, operand 0']
    #allocation3 [shape = 's32[2]{0}', space=sflag, size = 0x8, scoped, tag = 'scoped memory for tpu_custom_call.1']
    #allocation4 [shape = 'u8[4096]{0}', space=vmem, size = 0x1000, scoped, tag = 'output window, operand 1']
    #allocation5 [shape = 's32[2]{0}', space=sflag, size = 0x8, scoped, tag = 'scoped memory for tpu_custom_call.1']
    #allocation6 [shape = 'u8[4096]{0}', space=vmem, size = 0x1000, scoped, tag = 'output window, operand 2']
    %16 = vsyncpa [#allocation3], 0
    %s17 = scalar_lea.sflag [#allocation3], 1
    %18 = vsyncpa %s17, 0
    %19 = vsyncpa [#allocation5], 0
    %s20 = scalar_lea.sflag [#allocation5], 1
    %21 = vsyncpa %s20, 0
    loop: start=0, step=1, limit=4
    $region2: #{tpu_custom_call.1} parent=1 // loop_pre_header
      _
    $region3: #{tpu_custom_call.1} parent=1 // loop_header
      %s23 = sphi 0, %s27
      %p24 = scmp.ge.s32.totalorder %s23, 4
      %s30 = sphi 0, %s42
      %s31 = sphi 0, %s38
      %s32 = sphi 0, %s30
      %s33 = sphi 0, %s31
      %s34 = sphi 0, %s32
      %s35 = sphi 0, %s33
      %s47 = sphi 0, %s49
      %s50 = sphi 0, %s47
      %s51 = sphi 0, %s50
      %s67 = sphi 0, %s51
      %s71 = sphi 0, %s71
      %s73 = sphi 0, %s71
      %s74 = sphi 0, %s73
      %s88 = sphi 0, %s74
      %s92 = sphi 0, %s92
      %s94 = sphi 0, %s92
      %s95 = sphi 0, %s94
      %s109 = sphi 0, %s95
      %s113 = sphi 0, %s113
      %s115 = sphi 0, %s113
      %s116 = sphi 0, %s115
      %s130 = sphi 0, %s116
      %s134 = sphi 0, %s134
      %s136 = sphi 0, %s134
      %s137 = sphi 0, %s136
      %s151 = sphi 0, %s137
      %s155 = sphi 0, %s155
      %s157 = sphi 0, %s155
      %s158 = sphi 0, %s157
      %s172 = sphi 0, %s158
      %s178 = sphi 0, %s180
      %s181 = sphi 0, %s178
      %s182 = sphi 0, %s181
      %s198 = sphi 0, %s182
      %s204 = sphi 0, %s206
      %s207 = sphi 0, %s204
      %s208 = sphi 0, %s207
      %s224 = sphi 0, %s208
      %s232 = sphi 0, %s234
      %s235 = sphi 0, %s232
      %s236 = sphi 0, %s235
      %s252 = sphi 0, %s236
      %s260 = sphi 0, %s262
      %s263 = sphi 0, %s260
      %s264 = sphi 0, %s263
      %s280 = sphi 0, %s264
      %s288 = sphi 0, %s290
      %s291 = sphi 0, %s288
      %s292 = sphi 0, %s291
      %s308 = sphi 0, %s292
    $region4: #{tpu_custom_call.1} parent=1 // loop_header_branch
      %26 = sbr.rel (%p24) target = $region8
    $region5: #{tpu_custom_call.1} parent=1 // loop_body
      %s28 = ssub.s32 %s23, 1
      %s29 = ssub.s32 %s23, 2
      %s36 = sadd.s32 1, %s31
      %p37 = scmp.ge.s32.totalorder %s36, 1
      %s38 = scalar_select %p37, 0, %s36
      %s39 = sadd.s32 1, %s30
      %s40 = scalar_select %p37, %s39, %s30
      %p41 = scmp.ge.s32.totalorder %s40, 2
      %s42 = scalar_select %p41, 0, %s40
      %s43 = ssub.s32 %s30, %s42
      %s44 = ssub.s32 %s31, %s38
      %s45 = sor.u32 %s43, %s44
      %p46 = scmp.eq.s32.totalorder %s45, 0
      %s48 = sadd.s32 %s47, 1
      %s49 = scalar_select %p46, %s47, %s48
      %p52 = pneg %p46
      %p53 = scmp.eq.s32.totalorder %s23, 1
      %p54 = por %p52, %p53
      %p55 = scmp.ne.s32.totalorder %s47, %s50
      %p56 = scmp.eq.s32.totalorder %s23, 0
      %p57 = por %p55, %p56
      %p58 = scmp.ne.s32.totalorder %s47, %s50
      %p59 = scmp.eq.s32.totalorder %s28, 1
      %p60 = por %p58, %p59
      %p61 = scmp.ne.s32.totalorder %s50, %s51
      %p62 = scmp.eq.s32.totalorder %s28, 0
      %p63 = por %p61, %p62
      %p64 = scmp.ne.s32.totalorder %s50, %s51
      %p65 = scmp.eq.s32.totalorder %s29, 1
      %p66 = por %p64, %p65
      %p68 = scmp.ne.s32.totalorder %s51, %s67
      %p69 = scmp.eq.s32.totalorder %s29, 0
      %p70 = por %p68, %p69
      %s72 = sadd.s32 %s71, 1
      %p75 = scmp.eq.s32.totalorder %s23, 1
      %p76 = scmp.ne.s32.totalorder %s71, %s73
      %p77 = scmp.eq.s32.totalorder %s23, 0
      %p78 = por %p76, %p77
      %p79 = scmp.ne.s32.totalorder %s71, %s73
      %p80 = scmp.eq.s32.totalorder %s28, 1
      %p81 = por %p79, %p80
      %p82 = scmp.ne.s32.totalorder %s73, %s74
      %p83 = scmp.eq.s32.totalorder %s28, 0
      %p84 = por %p82, %p83
      %p85 = scmp.ne.s32.totalorder %s73, %s74
      %p86 = scmp.eq.s32.totalorder %s29, 1
      %p87 = por %p85, %p86
      %p89 = scmp.ne.s32.totalorder %s74, %s88
      %p90 = scmp.eq.s32.totalorder %s29, 0
      %p91 = por %p89, %p90
      %s93 = sadd.s32 %s92, 1
      %p96 = scmp.eq.s32.totalorder %s23, 1
      %p97 = scmp.ne.s32.totalorder %s92, %s94
      %p98 = scmp.eq.s32.totalorder %s23, 0
      %p99 = por %p97, %p98
      %p100 = scmp.ne.s32.totalorder %s92, %s94
      %p101 = scmp.eq.s32.totalorder %s28, 1
      %p102 = por %p100, %p101
      %p103 = scmp.ne.s32.totalorder %s94, %s95
      %p104 = scmp.eq.s32.totalorder %s28, 0
      %p105 = por %p103, %p104
      %p106 = scmp.ne.s32.totalorder %s94, %s95
      %p107 = scmp.eq.s32.totalorder %s29, 1
      %p108 = por %p106, %p107
      %p110 = scmp.ne.s32.totalorder %s95, %s109
      %p111 = scmp.eq.s32.totalorder %s29, 0
      %p112 = por %p110, %p111
      %s114 = sadd.s32 %s113, 1
      %p117 = scmp.eq.s32.totalorder %s23, 1
      %p118 = scmp.ne.s32.totalorder %s113, %s115
      %p119 = scmp.eq.s32.totalorder %s23, 0
      %p120 = por %p118, %p119
      %p121 = scmp.ne.s32.totalorder %s113, %s115
      %p122 = scmp.eq.s32.totalorder %s28, 1
      %p123 = por %p121, %p122
      %p124 = scmp.ne.s32.totalorder %s115, %s116
      %p125 = scmp.eq.s32.totalorder %s28, 0
      %p126 = por %p124, %p125
      %p127 = scmp.ne.s32.totalorder %s115, %s116
      %p128 = scmp.eq.s32.totalorder %s29, 1
      %p129 = por %p127, %p128
      %p131 = scmp.ne.s32.totalorder %s116, %s130
      %p132 = scmp.eq.s32.totalorder %s29, 0
      %p133 = por %p131, %p132
      %s135 = sadd.s32 %s134, 1
      %p138 = scmp.eq.s32.totalorder %s23, 1
      %p139 = scmp.ne.s32.totalorder %s134, %s136
      %p140 = scmp.eq.s32.totalorder %s23, 0
      %p141 = por %p139, %p140
      %p142 = scmp.ne.s32.totalorder %s134, %s136
      %p143 = scmp.eq.s32.totalorder %s28, 1
      %p144 = por %p142, %p143
      %p145 = scmp.ne.s32.totalorder %s136, %s137
      %p146 = scmp.eq.s32.totalorder %s28, 0
      %p147 = por %p145, %p146
      %p148 = scmp.ne.s32.totalorder %s136, %s137
      %p149 = scmp.eq.s32.totalorder %s29, 1
      %p150 = por %p148, %p149
      %p152 = scmp.ne.s32.totalorder %s137, %s151
      %p153 = scmp.eq.s32.totalorder %s29, 0
      %p154 = por %p152, %p153
      %s156 = sadd.s32 %s155, 1
      %p159 = scmp.eq.s32.totalorder %s23, 1
      %p160 = scmp.ne.s32.totalorder %s155, %s157
      %p161 = scmp.eq.s32.totalorder %s23, 0
      %p162 = por %p160, %p161
      %p163 = scmp.ne.s32.totalorder %s155, %s157
      %p164 = scmp.eq.s32.totalorder %s28, 1
      %p165 = por %p163, %p164
      %p166 = scmp.ne.s32.totalorder %s157, %s158
      %p167 = scmp.eq.s32.totalorder %s28, 0
      %p168 = por %p166, %p167
      %p169 = scmp.ne.s32.totalorder %s157, %s158
      %p170 = scmp.eq.s32.totalorder %s29, 1
      %p171 = por %p169, %p170
      %p173 = scmp.ne.s32.totalorder %s158, %s172
      %p174 = scmp.eq.s32.totalorder %s29, 0
      %p175 = por %p173, %p174
      %s176 = ssub.s32 %s31, %s38
      %p177 = scmp.eq.s32.totalorder %s176, 0
      %s179 = sadd.s32 %s178, 1
      %s180 = scalar_select %p177, %s178, %s179
      %p183 = pneg %p177
      %p184 = scmp.eq.s32.totalorder %s23, 1
      %p185 = por %p183, %p184
      %p186 = scmp.ne.s32.totalorder %s178, %s181
      %p187 = scmp.eq.s32.totalorder %s23, 0
      %p188 = por %p186, %p187
      %p189 = scmp.ne.s32.totalorder %s178, %s181
      %p190 = scmp.eq.s32.totalorder %s28, 1
      %p191 = por %p189, %p190
      %p192 = scmp.ne.s32.totalorder %s181, %s182
      %p193 = scmp.eq.s32.totalorder %s28, 0
      %p194 = por %p192, %p193
      %p195 = scmp.ne.s32.totalorder %s181, %s182
      %p196 = scmp.eq.s32.totalorder %s29, 1
      %p197 = por %p195, %p196
      %p199 = scmp.ne.s32.totalorder %s182, %s198
      %p200 = scmp.eq.s32.totalorder %s29, 0
      %p201 = por %p199, %p200
      %s202 = ssub.s32 %s31, %s38
      %p203 = scmp.eq.s32.totalorder %s202, 0
      %s205 = sadd.s32 %s204, 1
      %s206 = scalar_select %p203, %s204, %s205
      %p209 = pneg %p203
      %p210 = scmp.eq.s32.totalorder %s23, 1
      %p211 = por %p209, %p210
      %p212 = scmp.ne.s32.totalorder %s204, %s207
      %p213 = scmp.eq.s32.totalorder %s23, 0
      %p214 = por %p212, %p213
      %p215 = scmp.ne.s32.totalorder %s204, %s207
      %p216 = scmp.eq.s32.totalorder %s28, 1
      %p217 = por %p215, %p216
      %p218 = scmp.ne.s32.totalorder %s207, %s208
      %p219 = scmp.eq.s32.totalorder %s28, 0
      %p220 = por %p218, %p219
      %p221 = scmp.ne.s32.totalorder %s207, %s208
      %p222 = scmp.eq.s32.totalorder %s29, 1
      %p223 = por %p221, %p222
      %p225 = scmp.ne.s32.totalorder %s208, %s224
      %p226 = scmp.eq.s32.totalorder %s29, 0
      %p227 = por %p225, %p226
      %s228 = ssub.s32 %s30, %s42
      %s229 = ssub.s32 %s31, %s38
      %s230 = sor.u32 %s228, %s229
      %p231 = scmp.eq.s32.totalorder %s230, 0
      %s233 = sadd.s32 %s232, 1
      %s234 = scalar_select %p231, %s232, %s233
      %p237 = pneg %p231
      %p238 = scmp.eq.s32.totalorder %s23, 1
      %p239 = por %p237, %p238
      %p240 = scmp.ne.s32.totalorder %s232, %s235
      %p241 = scmp.eq.s32.totalorder %s23, 0
      %p242 = por %p240, %p241
      %p243 = scmp.ne.s32.totalorder %s232, %s235
      %p244 = scmp.eq.s32.totalorder %s28, 1
      %p245 = por %p243, %p244
      %p246 = scmp.ne.s32.totalorder %s235, %s236
      %p247 = scmp.eq.s32.totalorder %s28, 0
      %p248 = por %p246, %p247
      %p249 = scmp.ne.s32.totalorder %s235, %s236
      %p250 = scmp.eq.s32.totalorder %s29, 1
      %p251 = por %p249, %p250
      %p253 = scmp.ne.s32.totalorder %s236, %s252
      %p254 = scmp.eq.s32.totalorder %s29, 0
      %p255 = por %p253, %p254
      %s256 = ssub.s32 %s30, %s42
      %s257 = ssub.s32 %s31, %s38
      %s258 = sor.u32 %s256, %s257
      %p259 = scmp.eq.s32.totalorder %s258, 0
      %s261 = sadd.s32 %s260, 1
      %s262 = scalar_select %p259, %s260, %s261
      %p265 = pneg %p259
      %p266 = scmp.eq.s32.totalorder %s23, 1
      %p267 = por %p265, %p266
      %p268 = scmp.ne.s32.totalorder %s260, %s263
      %p269 = scmp.eq.s32.totalorder %s23, 0
      %p270 = por %p268, %p269
      %p271 = scmp.ne.s32.totalorder %s260, %s263
      %p272 = scmp.eq.s32.totalorder %s28, 1
      %p273 = por %p271, %p272
      %p274 = scmp.ne.s32.totalorder %s263, %s264
      %p275 = scmp.eq.s32.totalorder %s28, 0
      %p276 = por %p274, %p275
      %p277 = scmp.ne.s32.totalorder %s263, %s264
      %p278 = scmp.eq.s32.totalorder %s29, 1
      %p279 = por %p277, %p278
      %p281 = scmp.ne.s32.totalorder %s264, %s280
      %p282 = scmp.eq.s32.totalorder %s29, 0
      %p283 = por %p281, %p282
      %s284 = ssub.s32 %s30, %s42
      %s285 = ssub.s32 %s31, %s38
      %s286 = sor.u32 %s284, %s285
      %p287 = scmp.eq.s32.totalorder %s286, 0
      %s289 = sadd.s32 %s288, 1
      %s290 = scalar_select %p287, %s288, %s289
      %p293 = pneg %p287
      %p294 = scmp.eq.s32.totalorder %s23, 1
      %p295 = por %p293, %p294
      %p296 = scmp.ne.s32.totalorder %s288, %s291
      %p297 = scmp.eq.s32.totalorder %s23, 0
      %p298 = por %p296, %p297
      %p299 = scmp.ne.s32.totalorder %s288, %s291
      %p300 = scmp.eq.s32.totalorder %s28, 1
      %p301 = por %p299, %p300
      %p302 = scmp.ne.s32.totalorder %s291, %s292
      %p303 = scmp.eq.s32.totalorder %s28, 0
      %p304 = por %p302, %p303
      %p305 = scmp.ne.s32.totalorder %s291, %s292
      %p306 = scmp.eq.s32.totalorder %s29, 1
      %p307 = por %p305, %p306
      %p309 = scmp.ne.s32.totalorder %s292, %s308
      %p310 = scmp.eq.s32.totalorder %s29, 0
      %p311 = por %p309, %p310
      %p312 = scmp.le.s32.totalorder 1, %s23
      %p313 = scmp.lt.s32.totalorder %s23, 3
      %p314 = pnand %p312, %p313
      %p315 = pneg %p314
      // Predicated region
      $region9: #{tpu_custom_call.1} parent=5 // pred_check
        _
      $region10: #{tpu_custom_call.1} parent=5 // pred_check_branch
        %317 = sbr.rel (%p314) target = $region12
      $region11: #{tpu_custom_call.1} parent=5 // pred_region
        %s318 = ssub.s32 %s23, 1
        // Predicated region
        $region13: #{tpu_custom_call.1} parent=11 // pred_check
          %p319 = pneg %p84
        $region14: #{tpu_custom_call.1} parent=11 // pred_check_branch
          %321 = sbr.rel (%p319) target = $region16
        $region15: #{tpu_custom_call.1} parent=11 // pred_region
          _
        $region16: #{tpu_custom_call.1} parent=11 // pred_fallthru
          _
        // Predicated region
        $region17: #{tpu_custom_call.1} parent=11 // pred_check
          %p322 = pneg %p105
        $region18: #{tpu_custom_call.1} parent=11 // pred_check_branch
          %324 = sbr.rel (%p322) target = $region20
        $region19: #{tpu_custom_call.1} parent=11 // pred_region
          _
        $region20: #{tpu_custom_call.1} parent=11 // pred_fallthru
          _
        // Predicated region
        $region21: #{tpu_custom_call.1} parent=11 // pred_check
          %p325 = pneg %p126
        $region22: #{tpu_custom_call.1} parent=11 // pred_check_branch
          %327 = sbr.rel (%p325) target = $region24
        $region23: #{tpu_custom_call.1} parent=11 // pred_region
          _
        $region24: #{tpu_custom_call.1} parent=11 // pred_fallthru
          _
        // Predicated region
        $region25: #{tpu_custom_call.1} parent=11 // pred_check
          %p328 = pneg %p147
        $region26: #{tpu_custom_call.1} parent=11 // pred_check_branch
          %330 = sbr.rel (%p328) target = $region28
        $region27: #{tpu_custom_call.1} parent=11 // pred_region
          _
        $region28: #{tpu_custom_call.1} parent=11 // pred_fallthru
          _
        // Predicated region
        $region29: #{tpu_custom_call.1} parent=11 // pred_check
          %p331 = pneg %p168
        $region30: #{tpu_custom_call.1} parent=11 // pred_check_branch
          %333 = sbr.rel (%p331) target = $region32
        $region31: #{tpu_custom_call.1} parent=11 // pred_region
          _
        $region32: #{tpu_custom_call.1} parent=11 // pred_fallthru
          _
        // Predicated region
        $region33: #{tpu_custom_call.1} parent=11 // pred_check
          %p334 = pneg %p194
        $region34: #{tpu_custom_call.1} parent=11 // pred_check_branch
          %336 = sbr.rel (%p334) target = $region36
        $region35: #{tpu_custom_call.1} parent=11 // pred_region
          %p337 = scmp.lt.s32.totalorder %s33, 0
          %s338 = scalar_select %p337, %s33, 0
          %s339 = smul.addr %s338, 8
          %s340 = scalar_lea.vmem %s6, %s339
        $region36: #{tpu_custom_call.1} parent=11 // pred_fallthru
          _
        // Predicated region
        $region37: #{tpu_custom_call.1} parent=11 // pred_check
          %p341 = pneg %p220
        $region38: #{tpu_custom_call.1} parent=11 // pred_check_branch
          %343 = sbr.rel (%p341) target = $region40
        $region39: #{tpu_custom_call.1} parent=11 // pred_region
          %p344 = scmp.lt.s32.totalorder %s33, 0
          %s345 = scalar_select %p344, %s33, 0
          %s346 = smul.addr %s345, 8
          %s347 = scalar_lea.vmem %s7, %s346
        $region40: #{tpu_custom_call.1} parent=11 // pred_fallthru
          _
      $region12: #{tpu_custom_call.1} parent=5 // pred_fallthru
        _
      %p348 = scmp.lt.s32.totalorder %s23, 2
      // Predicated region
      $region41: #{tpu_custom_call.1} parent=5 // pred_check
        %p349 = pneg %p348
      $region42: #{tpu_custom_call.1} parent=5 // pred_check_branch
        %351 = sbr.rel (%p349) target = $region44
      $region43: #{tpu_custom_call.1} parent=5 // pred_region
        // Predicated region
        $region45: #{tpu_custom_call.1} parent=43 // pred_check
          %p352 = pneg %p57
        $region46: #{tpu_custom_call.1} parent=43 // pred_check_branch
          %354 = sbr.rel (%p352) target = $region48
        $region47: #{tpu_custom_call.1} parent=43 // pred_region
          %p355 = scmp.lt.s32.totalorder %s30, 1
          %s356 = scalar_select %p355, %s30, 1
          %p357 = scmp.lt.s32.totalorder %s31, 0
          %s358 = scalar_select %p357, %s31, 0
          %s359 = sadd.s32 %s358, %s356
          %s360 = smul.addr %s359, 4
          %s361 = scalar_lea.vmem %s0, %s360
        $region48: #{tpu_custom_call.1} parent=43 // pred_fallthru
          _
      $region44: #{tpu_custom_call.1} parent=5 // pred_fallthru
        _
      %p362 = scmp.le.s32.totalorder 1, %s23
      %p363 = scmp.lt.s32.totalorder %s23, 3
      %p364 = pnand %p362, %p363
      %p365 = pneg %p364
      // Predicated region
      $region49: #{tpu_custom_call.1} parent=5 // pred_check
        _
      $region50: #{tpu_custom_call.1} parent=5 // pred_check_branch
        %367 = sbr.rel (%p364) target = $region52
      $region51: #{tpu_custom_call.1} parent=5 // pred_region
        %s368 = ssub.s32 %s23, 1
        %p369 = scmp.lt.s32.totalorder %s32, 1
        %s370 = scalar_select %p369, %s32, 1
        %p371 = scmp.lt.s32.totalorder %s33, 0
        %s372 = scalar_select %p371, %s33, 0
        %s373 = sadd.s32 %s372, %s370
        %s374 = smul.addr %s373, 4
        %s375 = scalar_lea.vmem %s0, %s374
        %p376 = pneg %p63
        %p377 = pneg %p60
        %p378 = pneg %p84
        %p379 = pneg %p81
        %p380 = pneg %p105
        %p381 = pneg %p102
        %p382 = pneg %p126
        %p383 = pneg %p123
        %p384 = pneg %p147
        %p385 = pneg %p144
        %p386 = pneg %p168
        %p387 = pneg %p165
        %p388 = scmp.lt.s32.totalorder %s33, 0
        %s389 = scalar_select %p388, %s33, 0
        %s390 = smul.addr %s389, 8
        %s391 = scalar_lea.vmem %s6, %s390
        %p392 = pneg %p194
        %p393 = pneg %p191
        %p394 = scmp.lt.s32.totalorder %s33, 0
        %s395 = scalar_select %p394, %s33, 0
        %s396 = smul.addr %s395, 8
        %s397 = scalar_lea.vmem %s7, %s396
        %p398 = pneg %p220
        %p399 = pneg %p217
        %p400 = pneg %p248
        %p401 = pneg %p245
        %s402 = sand.u32 %s235, 1
        %s403 = scalar_lea.sflag [#allocation3], %s402
        %s404 = sand.u32 %s235, 1
        %s405 = smul.addr %s404, 4
        %s406 = scalar_lea.vmem [#allocation2], %s405
        %p407 = pneg %p276
        %p408 = pneg %p273
        %s409 = sand.u32 %s28, 1
        %s410 = scalar_lea.sflag [#allocation5], %s409
        %s411 = sand.u32 %s263, 1
        %s412 = smul.addr %s411, 4
        %s413 = scalar_lea.vmem [#allocation4], %s412
        %p414 = pneg %p304
        %p415 = pneg %p301
        %s416 = sand.u32 %s28, 1
        %s417 = scalar_lea.sflag [#allocation5], %s416
        %s418 = sand.u32 %s291, 1
        %s419 = smul.addr %s418, 4
        %s420 = scalar_lea.vmem [#allocation6], %s419
        %p421 = scmp.lt.s32.totalorder %s32, 1
        %s422 = scalar_select %p421, %s32, 1
        %p423 = scmp.lt.s32.totalorder %s33, 0
        %s424 = scalar_select %p423, %s33, 0
        %s425 = sadd.s32 %s424, %s422
        %s426 = smul.addr %s425, 4
        %s427 = scalar_lea.vmem %s0, %s426
        %p428 = scmp.lt.s32.totalorder %s33, 0
        %s429 = scalar_select %p428, %s33, 0
        %s430 = smul.addr %s429, 8
        %s431 = scalar_lea.vmem %s6, %s430
        %p432 = scmp.lt.s32.totalorder %s33, 0
        %s433 = scalar_select %p432, %s33, 0
        %s434 = smul.addr %s433, 8
        %s435 = scalar_lea.vmem %s7, %s434
        %v437 = vld [vmem:[%s427] sm:$0xf]
        %v438 = vld [vmem:[%s1] sm:$0xf]
        %v439 = vld [vmem:[%s1 + $0x4] sm:$0xf]
        %v440 = vld [vmem:[%s1 + $0x8] sm:$0xf]
        %v441 = vld [vmem:[%s1 + $0xc] sm:$0xf]
        %v446 = vunpack.c.l.b16 %v438
        %v447 = vunpack.c.l.b16 %v439
        %v448 = vunpack.c.l.b16 %v440
        %v449 = vunpack.c.l.b16 %v441
        %v450 = vpack.c.b16 %v447, %v446
        %v451 = vpack.c.b16 %v449, %v448
        %vm454 = vcmask 261120
        %v456 = vsel %vm454, %v437, 0
        %458 = vmatprep.subr.bf16.mxu0 0
        %459 = vmatpush1.bf16.msra.mxu0 %v450
        %460 = vmatprep.subr.bf16.mxu0 0
        %461 = vmatpush1.bf16.msra.mxu0 %v451
        %462 = vmatprep.subr.bf16.mxu0 0
        %463 = vmatpush1.bf16.msra.mxu0 0
        %464 = vmatprep.subr.bf16.mxu0 0
        %465 = vmatpush1.bf16.msra.mxu0 0
        %466 = vmatprep.subr.bf16.mxu0 0
        %467 = vmatpush1.bf16.msra.mxu0 0
        %468 = vmatprep.subr.bf16.mxu0 0
        %469 = vmatpush1.bf16.msra.mxu0 0
        %470 = vmatprep.subr.bf16.mxu0 0
        %471 = vmatpush1.bf16.msra.mxu0 0
        %472 = vmatprep.subr.bf16.mxu0 0
        %473 = vmatpush1.bf16.msra.mxu0 0
        %474 = vmatprep.subr.bf16.mxu0 0
        %475 = vmatpush1.bf16.msra.mxu0 0
        %476 = vmatprep.subr.bf16.mxu0 0
        %477 = vmatpush1.bf16.msra.mxu0 0
        %478 = vmatprep.subr.bf16.mxu0 0
        %479 = vmatpush1.bf16.msra.mxu0 0
        %480 = vmatprep.subr.bf16.mxu0 0
        %481 = vmatpush1.bf16.msra.mxu0 0
        %482 = vmatprep.subr.bf16.mxu0 0
        %483 = vmatpush1.bf16.msra.mxu0 0
        %484 = vmatprep.subr.bf16.mxu0 0
        %485 = vmatpush1.bf16.msra.mxu0 0
        %486 = vmatprep.subr.bf16.mxu0 0
        %487 = vmatpush1.bf16.msra.mxu0 0
        %488 = vmatprep.subr.bf16.mxu0 0
        %489 = vmatpush1.bf16.msra.mxu0 0
        %490 = vmatprep.mubr.bf16.mxu0 0
        %491 = vmatmul.mubr.bf16.gmra.mrb[0].mxu0 %v456
        %v492 = vpop.f32.mrb[0].mxu0
        %v493 = vadd.f32 0.0, %v492
        %v494 = vpop.f32.mrb[0].mxu0
        %v495 = vpop.f32.mrb[0].mxu0
        %v496 = vpop.f32.mrb[0].mxu0
        %497 = vdwg.mxu0
        %v498 = vld [vmem:[%s2] sm:$0x1]
        %v499 = vld [vmem:[%s3] sm:$0x1]
        %v500 = vsel %vm454, %v493, 0.0
        %501 = vadd.xlane.f32.xlu0 %v500
        %v502 = vpop.xlane.xlu0 %501
        %v503 = vrcp.pop 32.0
        %v504 = vmul.f32 %v502, %v503
        %v505 = vsub.f32 %v493, %v504
        %v506 = vmul.f32 %v505, %v505
        %v507 = vsel %vm454, %v506, 0.0
        %508 = vadd.xlane.f32.xlu0 %v507
        %v509 = vpop.xlane.xlu0 %508
        %v510 = vmul.f32 %v509, %v503
        %v511 = vadd.f32 %v510, 1e-05
        %v512 = vrsqrt.pop %v511
        %v513 = vmul.f32 %v505, %v512
        %v515 = vlaneseq
        %v516 = vshrl.u32 %v515, 7
        %v517 = vsub.s32 0, %v516
        %v518 = vrot.slane %v498, %v517
        %v520 = vmul.f32 %v513, %v518
        %v522 = vlaneseq
        %v523 = vshrl.u32 %v522, 7
        %v524 = vsub.s32 0, %v523
        %v525 = vrot.slane %v499, %v524
        %v527 = vadd.f32 %v520, %v525
        %v528 = vld [vmem:[%s4] sm:$0x1]
        %v529 = vld [vmem:[%s5] sm:$0x1]
        %531 = vrot.lane.b32.xlu0 %v493, 96
        %v532 = vpop.permute.xlu0 %531
        %v534 = vsel %vm454, %v532, 0.0
        %535 = vadd.xlane.f32.xlu0 %v534
        %v536 = vpop.xlane.xlu0 %535
        %v537 = vmul.f32 %v536, %v503
        %v538 = vsub.f32 %v493, %v537
        %v539 = vmul.f32 %v538, %v538
        %541 = vrot.lane.b32.xlu0 %v539, 96
        %v542 = vpop.permute.xlu0 %541
        %v544 = vsel %vm454, %v542, 0.0
        %545 = vadd.xlane.f32.xlu0 %v544
        %v546 = vpop.xlane.xlu0 %545
        %v547 = vmul.f32 %v546, %v503
        %v548 = vadd.f32 %v547, 1e-05
        %v549 = vrsqrt.pop %v548
        %v550 = vmul.f32 %v538, %v549
        %v552 = vlaneseq
        %v553 = vshrl.u32 %v552, 7
        %v554 = vsub.s32 0, %v553
        %v555 = vrot.slane %v528, %v554
        %556 = vrot.lane.b32.xlu0 %v555, 32
        %v557 = vpop.permute.xlu0 %556
        %v559 = vmul.f32 %v550, %v557
        %v561 = vlaneseq
        %v562 = vshrl.u32 %v561, 7
        %v563 = vsub.s32 0, %v562
        %v564 = vrot.slane %v529, %v563
        %565 = vrot.lane.b32.xlu0 %v564, 32
        %v566 = vpop.permute.xlu0 %565
        %v568 = vadd.f32 %v559, %v566
        %v569 = vld [vmem:[%s431] sm:$0xff]
        %571 = vrot.lane.b32.xlu0 %v569, 4
        %v572 = vpop.permute.xlu0 %571
        %574 = vrot.lane.b32.xlu0 %v569, 8
        %v575 = vpop.permute.xlu0 %574
        %577 = vrot.lane.b32.xlu0 %v569, 12
        %v578 = vpop.permute.xlu0 %577
        %vm580 = vcmask 31744
        %v581 = vsel %vm580, %v569, %v572
        %vm582 = vcmask 64512
        %v583 = vsel %vm582, %v581, %v575
        %vm584 = vcmask 97280
        %v585 = vsel %vm584, %v583, %v578
        %v586 = vld [vmem:[%s435] sm:$0xff]
        %588 = vrot.lane.b32.xlu0 %v586, 4
        %v589 = vpop.permute.xlu0 %588
        %591 = vrot.lane.b32.xlu0 %v586, 8
        %v592 = vpop.permute.xlu0 %591
        %594 = vrot.lane.b32.xlu0 %v586, 12
        %v595 = vpop.permute.xlu0 %594
        %v597 = vsel %vm580, %v586, %v589
        %v598 = vsel %vm582, %v597, %v592
        %v599 = vsel %vm584, %v598, %v595
        %v600 = vmul.f32 %v527, %v585
        %602 = vrot.lane.b32.xlu0 %v599, 16
        %v603 = vpop.permute.xlu0 %602
        %v605 = vmul.f32 %v527, %v603
        %607 = vrot.lane.b32.xlu0 %v605, 112
        %v608 = vpop.permute.xlu0 %607
        %v610 = vsub.f32 %v600, %v608
        %v611 = vpack.c.bf16 %v610, %v610
        %vm612 = vcmask 125952
        %613 = vst.msk [vmem:[%s406] sm:$0xf] %vm612, %v611
        %615 = vrot.lane.b32.xlu0 %v585, 16
        %v616 = vpop.permute.xlu0 %615
        %v618 = vmul.f32 %v527, %v616
        %v619 = vmul.f32 %v527, %v599
        %621 = vrot.lane.b32.xlu0 %v619, 16
        %v622 = vpop.permute.xlu0 %621
        %v624 = vadd.f32 %v618, %v622
        %v625 = vpack.c.bf16 %v624, %v624
        %vm626 = vcmask 257152
        %627 = vst.msk [vmem:[%s406] sm:$0xf] %vm626, %v625
        %628 = vrot.lane.b32.xlu0 %v585, 32
        %v629 = vpop.permute.xlu0 %628
        %v631 = vmul.f32 %v568, %v629
        %632 = vrot.lane.b32.xlu0 %v599, 48
        %v633 = vpop.permute.xlu0 %632
        %v635 = vmul.f32 %v568, %v633
        %637 = vrot.lane.b32.xlu0 %v635, 112
        %v638 = vpop.permute.xlu0 %637
        %v640 = vsub.f32 %v631, %v638
        %v641 = vpack.c.bf16 %v640, %v640
        %v643 = vunpack.c.l.b16 %v641
        %v644 = vpack.c.b16 %v643, %v643
        %645 = vrot.lane.b32.xlu0 %v644, 96
        %v646 = vpop.permute.xlu0 %645
        %648 = vst.msk [vmem:[%s413] sm:$0xf] %vm612, %v646
        %649 = vrot.lane.b32.xlu0 %v585, 48
        %v650 = vpop.permute.xlu0 %649
        %v652 = vmul.f32 %v568, %v650
        %653 = vrot.lane.b32.xlu0 %v599, 32
        %v654 = vpop.permute.xlu0 %653
        %v656 = vmul.f32 %v568, %v654
        %658 = vrot.lane.b32.xlu0 %v656, 16
        %v659 = vpop.permute.xlu0 %658
        %v661 = vadd.f32 %v652, %v659
        %v662 = vpack.c.bf16 %v661, %v661
        %v664 = vunpack.c.l.b16 %v662
        %v665 = vpack.c.b16 %v664, %v664
        %666 = vrot.lane.b32.xlu0 %v665, 96
        %v667 = vpop.permute.xlu0 %666
        %669 = vst.msk [vmem:[%s413] sm:$0xf] %vm626, %v667
        %v670 = vpack.c.bf16 %v493, %v493
        %v672 = vunpack.c.l.b16 %v670
        %v673 = vpack.c.b16 %v672, %v672
        %674 = vrot.lane.b32.xlu0 %v673, 64
        %v675 = vpop.permute.xlu0 %674
        %vm677 = vcmask 257024
        %678 = vst.msk [vmem:[%s420] sm:$0xf] %vm677, %v675
        %s679 = sand.u32 %s235, 1
        %s680 = scalar_lea.sflag [#allocation3], %s679
        %s681 = sand.u32 %s235, 1
        %s682 = smul.addr %s681, 4
        %s683 = scalar_lea.vmem [#allocation2], %s682
        %s684 = sand.u32 %s28, 1
        %s685 = scalar_lea.sflag [#allocation5], %s684
        %s686 = sand.u32 %s263, 1
        %s687 = smul.addr %s686, 4
        %s688 = scalar_lea.vmem [#allocation4], %s687
        %s689 = sand.u32 %s28, 1
        %s690 = scalar_lea.sflag [#allocation5], %s689
        %s691 = sand.u32 %s291, 1
        %s692 = smul.addr %s691, 4
        %s693 = scalar_lea.vmem [#allocation6], %s692
        // Predicated region
        $region53: #{tpu_custom_call.1} parent=51 // pred_check
          %p694 = pneg %p245
        $region54: #{tpu_custom_call.1} parent=51 // pred_check_branch
          %696 = sbr.rel (%p694) target = $region56
        $region55: #{tpu_custom_call.1} parent=51 // pred_region
          %s698 = ssub.s32 64, 64
          %699 = vsyncadd %s680, %s698
          %s700 = sadd.s32 %s33, %s32
          %s701 = smul.addr %s700, 64
          %s702 = scalar_lea.hbm %s8, %s701
          %s704 = sshll.u32 %s683, 4
          %s705 = int_to_ptr.vmem [resolvable:$true] %s704
          %707 = dma.vmem_to_hbm [thread:$0]  %s705, 64, %s702, %s680
        $region56: #{tpu_custom_call.1} parent=51 // pred_fallthru
          _
        // Predicated region
        $region57: #{tpu_custom_call.1} parent=51 // pred_check
          %p708 = pneg %p273
        $region58: #{tpu_custom_call.1} parent=51 // pred_check_branch
          %710 = sbr.rel (%p708) target = $region60
        $region59: #{tpu_custom_call.1} parent=51 // pred_region
          %s712 = ssub.s32 64, 64
          %713 = vsyncadd %s685, %s712
          %s714 = sadd.s32 %s33, %s32
          %s715 = smul.addr %s714, 64
          %s716 = scalar_lea.hbm %s9, %s715
          %s718 = sshll.u32 %s688, 4
          %s719 = int_to_ptr.vmem [resolvable:$true] %s718
          %721 = dma.vmem_to_hbm [thread:$0]  %s719, 64, %s716, %s685
        $region60: #{tpu_custom_call.1} parent=51 // pred_fallthru
          _
        // Predicated region
        $region61: #{tpu_custom_call.1} parent=51 // pred_check
          %p722 = pneg %p301
        $region62: #{tpu_custom_call.1} parent=51 // pred_check_branch
          %724 = sbr.rel (%p722) target = $region64
        $region63: #{tpu_custom_call.1} parent=51 // pred_region
          %s726 = ssub.s32 64, 64
          %727 = vsyncadd %s690, %s726
          %s728 = sadd.s32 %s33, %s32
          %s729 = smul.addr %s728, 64
          %s730 = scalar_lea.hbm %s10, %s729
          %s732 = sshll.u32 %s693, 4
          %s733 = int_to_ptr.vmem [resolvable:$true] %s732
          %735 = dma.vmem_to_hbm [thread:$0]  %s733, 64, %s730, %s690
        $region64: #{tpu_custom_call.1} parent=51 // pred_fallthru
          _
      $region52: #{tpu_custom_call.1} parent=5 // pred_fallthru
        _
      %p736 = scmp.le.s32.totalorder 2, %s23
      // Predicated region
      $region65: #{tpu_custom_call.1} parent=5 // pred_check
        %p737 = pneg %p736
      $region66: #{tpu_custom_call.1} parent=5 // pred_check_branch
        %739 = sbr.rel (%p737) target = $region68
      $region67: #{tpu_custom_call.1} parent=5 // pred_region
        %s740 = ssub.s32 %s23, 2
        // Predicated region
        $region69: #{tpu_custom_call.1} parent=67 // pred_check
          %p741 = pneg %p251
        $region70: #{tpu_custom_call.1} parent=67 // pred_check_branch
          %743 = sbr.rel (%p741) target = $region72
        $region71: #{tpu_custom_call.1} parent=67 // pred_region
          %s744 = sand.u32 %s236, 1
          %s745 = scalar_lea.sflag [#allocation3], %s744
          %s746 = sand.u32 %s236, 1
          %s747 = smul.addr %s746, 4
          %s748 = scalar_lea.vmem [#allocation2], %s747
          %749 = dma.done %s745, 64
        $region72: #{tpu_custom_call.1} parent=67 // pred_fallthru
          _
        // Predicated region
        $region73: #{tpu_custom_call.1} parent=67 // pred_check
          %p750 = pneg %p279
        $region74: #{tpu_custom_call.1} parent=67 // pred_check_branch
          %752 = sbr.rel (%p750) target = $region76
        $region75: #{tpu_custom_call.1} parent=67 // pred_region
          %s753 = sand.u32 %s29, 1
          %s754 = scalar_lea.sflag [#allocation5], %s753
          %s755 = sand.u32 %s264, 1
          %s756 = smul.addr %s755, 4
          %s757 = scalar_lea.vmem [#allocation4], %s756
          %758 = dma.done %s754, 64
        $region76: #{tpu_custom_call.1} parent=67 // pred_fallthru
          _
        // Predicated region
        $region77: #{tpu_custom_call.1} parent=67 // pred_check
          %p759 = pneg %p307
        $region78: #{tpu_custom_call.1} parent=67 // pred_check_branch
          %761 = sbr.rel (%p759) target = $region80
        $region79: #{tpu_custom_call.1} parent=67 // pred_region
          %s762 = sand.u32 %s29, 1
          %s763 = scalar_lea.sflag [#allocation5], %s762
          %s764 = sand.u32 %s292, 1
          %s765 = smul.addr %s764, 4
          %s766 = scalar_lea.vmem [#allocation6], %s765
          %767 = dma.done %s763, 64
        $region80: #{tpu_custom_call.1} parent=67 // pred_fallthru
          _
      $region68: #{tpu_custom_call.1} parent=5 // pred_fallthru
        _
    $region6: #{tpu_custom_call.1} parent=1 // loop_footer
      %s27 = sadd.s32 1, %s23
    $region7: #{tpu_custom_call.1} parent=1 // loop_footer_branch
      %22 = sbr.rel target = $region3
    $region8: #{tpu_custom_call.1} parent=1 // loop_exit
      _
    %768 = vsyncpa [#allocation3], 1
    %s769 = scalar_lea.sflag [#allocation3], 1
    %770 = vsyncpa %s769, 1
    %771 = vsyncpa [#allocation5], 1
    %s772 = scalar_lea.sflag [#allocation5], 1
    %773 = vsyncpa %s772, 1

</llo_original>
